<compile_context>
chip_gen: v7x
topology: tpu7x:2x2x1
jax: 0.10.0
libtpu: 0.0.40
codegen_flags: <defaults>
</compile_context>

<pallas_src>
import functools

import jax
import jax.numpy as jnp
from jax.experimental import pallas as pl
from jax.experimental.pallas import tpu as pltpu


def _cdiv(a, b):
    return -(-a // b)


def _round_up(a, b):
    return _cdiv(a, b) * b


# --------------------------------------------------------------------------
# Sort-key helpers: map f32 bits to an int32 whose signed ordering matches the
# float order (+NaN largest, like torch). The mapping is an involution, so the
# same formula recovers the value bits.
# --------------------------------------------------------------------------
def _f32_bits_to_key(bits):
    int_max = jnp.int32(0x7FFFFFFF)
    return jnp.where(bits < 0, jnp.bitwise_xor(bits, int_max), bits)


def _key_to_f32(key):
    int_max = jnp.int32(0x7FFFFFFF)
    bits = jnp.where(key < 0, jnp.bitwise_xor(key, int_max), key)
    return pltpu.bitcast(bits, jnp.float32)


# --------------------------------------------------------------------------
# Small-N kernel: x_ref is a natural-layout (L, N) block of rows. It is
# transposed in VMEM so the reduced axis (N) sits on sublanes and the 128-wide
# lane axis carries rows; outputs are written once as a lane-dense (k, L) tile.
# --------------------------------------------------------------------------
def _topk_lanes_kernel(x_ref, vals_ref, idx_ref, *, k, largest):
    xf = x_ref[...].astype(jnp.float32)
    xt = jnp.transpose(xf, (1, 0))                       # (N, L) in-VMEM (XLU)
    N, L = xt.shape
    int_min = jnp.int32(-0x80000000)

    key = _f32_bits_to_key(pltpu.bitcast(xt, jnp.int32))
    if not largest:
        key = jnp.bitwise_not(key)                       # reverses the order
    key = jnp.maximum(key, int_min + 1)                  # INT_MIN reserved as sentinel

    sub_iota = jax.lax.broadcasted_iota(jnp.int32, (N, L), 0)
    cand = key
    val_rows, idx_rows = [], []
    for _ in range(k):                                   # k small & static -> unrolled
        m = jnp.max(cand, axis=0, keepdims=True)                           # (1, L)
        idx = jnp.min(jnp.where(cand == m, sub_iota, jnp.int32(N)),
                      axis=0, keepdims=True)                               # first hit
        cand = jnp.where(sub_iota == idx, int_min, cand)                   # knock out
        mk = m if largest else jnp.bitwise_not(m)
        val_rows.append(_key_to_f32(mk))
        idx_rows.append(idx)

    # single lane-dense store per tile
    vals_ref[...] = jnp.concatenate(val_rows, axis=0).astype(vals_ref.dtype)
    idx_ref[...] = jnp.concatenate(idx_rows, axis=0)


def _topk_lanes(x2, k, largest):
    R, N = x2.shape
    out_dtype = x2.dtype

    nb_total = _cdiv(R, 128)                             # 128-lane blocks needed
    # ~2 MiB f32 input tiles (amortizes the ~0.35us/step overhead); cap at 4096 lanes.
    bpt = max(1, min(nb_total, 32, (2 * 1024 * 1024) // (N * 128 * 4)))
    # prefer >= 2 grid steps (v7x: two TensorCores) as long as tiles stay >= 1024 lanes
    if _cdiv(nb_total, bpt) == 1 and bpt > 8:
        bpt = max(8, _cdiv(nb_total, 2))
    L = 128 * bpt
    grid = (_cdiv(R, L),)                                # partial edge blocks are masked

    kern = functools.partial(_topk_lanes_kernel, k=k, largest=largest)
    vals_t, idx_t = pl.pallas_call(
        kern,
        out_shape=(
            jax.ShapeDtypeStruct((k, R), out_dtype),
            jax.ShapeDtypeStruct((k, R), jnp.int32),
        ),
        grid_spec=pltpu.PrefetchScalarGridSpec(
            num_scalar_prefetch=0,
            grid=grid,
            in_specs=[pl.BlockSpec((L, N), lambda i: (i, 0))],
            out_specs=[
                pl.BlockSpec((k, L), lambda i: (0, i)),
                pl.BlockSpec((k, L), lambda i: (0, i)),
            ],
        ),
        compiler_params=pltpu.CompilerParams(
            dimension_semantics=("parallel",),
            # needed on v5e (16 MiB default scoped VMEM); safe on v7x (64 MiB physical)
            vmem_limit_bytes=32 * 1024 * 1024,
        ),
    )(x2)
    # output transpose is tiny (k*R elements, k << N)
    return vals_t.T, idx_t.T


# --------------------------------------------------------------------------
# Wide-N streaming kernel: rows on sublanes, reduced axis chunked along lanes.
# Carries a per-row running top-k (keys + global indices) in VMEM scratch and
# merges each chunk; writes outputs once on the last chunk.
# --------------------------------------------------------------------------
def _topk_rows_kernel(x_ref, vals_ref, idx_ref, run_key, run_idx, *,
                      k, largest, n_total):
    j = pl.program_id(1)
    nc = pl.num_programs(1)
    int_min = jnp.int32(-0x80000000)
    int_max = jnp.int32(0x7FFFFFFF)

    xf = x_ref[...].astype(jnp.float32)
    tr, tn = xf.shape

    @pl.when(j == 0)
    def _():
        run_key[...] = jnp.full((tr, k), int_min, jnp.int32)
        # distinct huge sentinel indices so knockout-by-index stays unique
        run_idx[...] = (int_max - jnp.int32(k)) + jax.lax.broadcasted_iota(
            jnp.int32, (tr, k), 1)

    key = _f32_bits_to_key(pltpu.bitcast(xf, jnp.int32))
    if not largest:
        key = jnp.bitwise_not(key)
    key = jnp.maximum(key, int_min + 1)                  # INT_MIN reserved as sentinel

    lane = jax.lax.broadcasted_iota(jnp.int32, (tr, tn), 1)
    gcol = j * tn + lane                                 # global column index
    key = jnp.where(gcol < n_total, key, int_min)        # mask OOB lanes of last chunk

    cand = jnp.concatenate([run_key[...], key], axis=1)  # (tr, k + tn)
    gidx = jnp.concatenate([run_idx[...], gcol], axis=1)

    new_k, new_i = [], []
    for _ in range(k):                                   # k small & static -> unrolled
        m = jnp.max(cand, axis=1, keepdims=True)                           # (tr, 1)
        hit = cand == m
        gi = jnp.min(jnp.where(hit, gidx, int_max), axis=1, keepdims=True) # first hit
        cand = jnp.where(gidx == gi, int_min, cand)      # knock out by unique index
        new_k.append(m)
        new_i.append(gi)

    vk = jnp.concatenate(new_k, axis=1)                  # (tr, k) running top-k
    vi = jnp.concatenate(new_i, axis=1)
    run_key[...] = vk
    run_idx[...] = vi

    @pl.when(j == nc - 1)
    def _():
        mk = vk if largest else jnp.bitwise_not(vk)
        vals_ref[...] = _key_to_f32(mk).astype(vals_ref.dtype)   # one store per tile
        idx_ref[...] = vi


def _topk_rows(x2, k, largest):
    R, N = x2.shape
    out_dtype = x2.dtype

    tn = 512                                             # ~512 KiB f32 chunks along N
    tr = min(256, _round_up(R, 8))
    # keep >= 2 row tiles when possible so v7x's two TensorCores both get work
    if _cdiv(R, tr) == 1 and tr > 8:
        tr = max(8, _round_up(_cdiv(R, 2), 8))
    grid = (_cdiv(R, tr), _cdiv(N, tn))

    kern = functools.partial(_topk_rows_kernel, k=k, largest=largest, n_total=N)
    vals, idx = pl.pallas_call(
        kern,
        out_shape=(
            jax.ShapeDtypeStruct((R, k), out_dtype),
            jax.ShapeDtypeStruct((R, k), jnp.int32),
        ),
        grid_spec=pltpu.PrefetchScalarGridSpec(
            num_scalar_prefetch=0,
            grid=grid,
            in_specs=[pl.BlockSpec((tr, tn), lambda i, j: (i, j))],
            out_specs=[
                pl.BlockSpec((tr, k), lambda i, j: (i, 0)),
                pl.BlockSpec((tr, k), lambda i, j: (i, 0)),
            ],
            scratch_shapes=[
                pltpu.VMEM((tr, k), jnp.int32),          # running top-k keys
                pltpu.VMEM((tr, k), jnp.int32),          # running top-k indices
            ],
        ),
        compiler_params=pltpu.CompilerParams(
            dimension_semantics=("parallel", "arbitrary"),
            vmem_limit_bytes=32 * 1024 * 1024,
        ),
    )(x2)
    return vals, idx


# --------------------------------------------------------------------------
# Public wrapper: move the top-k axis to the end, flatten the rest into rows,
# dispatch on N (single layout op in the wrapper; no extra transpose).
# --------------------------------------------------------------------------
def topk_pallas(x, k, dim, largest):
    dim = dim % x.ndim
    xt = jnp.moveaxis(x, dim, -1)                        # no-op if dim is last
    lead_shape = xt.shape[:-1]
    N = xt.shape[-1]
    R = 1
    for s in lead_shape:
        R *= s
    x2 = xt.reshape(R, N)

    if N <= 512:
        vals2, idx2 = _topk_lanes(x2, k, largest)
    else:
        vals2, idx2 = _topk_rows(x2, k, largest)

    vals = jnp.moveaxis(vals2.reshape(lead_shape + (k,)), -1, dim)
    idx = jnp.moveaxis(idx2.reshape(lead_shape + (k,)), -1, dim)
    return vals, idx


def _reference_topk(x, k, dim, largest):
    dim = dim % x.ndim
    xt = jnp.moveaxis(x, dim, -1)
    if largest:
        v, i = jax.lax.top_k(xt, k)
    else:
        v, i = jax.lax.top_k(-xt, k)
        v = -v
    return jnp.moveaxis(v, -1, dim), jnp.moveaxis(i, -1, dim)


if __name__ == "__main__":
    key = jax.random.PRNGKey(0)
    k1, k2, k3 = jax.random.split(key, 3)

    def _check(x, kk, dim, largest):
        vals, idx = topk_pallas(x, k=kk, dim=dim, largest=largest)
        jax.block_until_ready((vals, idx))
        ref_vals, _ = _reference_topk(x, kk, dim, largest)
        good = bool(jnp.allclose(vals, ref_vals, atol=1e-6))
        # indices must gather back the reported values
        gathered = jnp.take_along_axis(x, idx.astype(jnp.int32), axis=dim % x.ndim)
        good &= bool(jnp.allclose(gathered, vals, atol=1e-6))
        if kk > 1:
            # indices along dim must be distinct (no duplicate picks on ties)
            si = jnp.sort(idx, axis=dim % x.ndim)
            good &= bool(jnp.all(jnp.diff(si, axis=dim % x.ndim) > 0))
        return good

    ok = True

    # small-N (lanes) path, dims last and not-last
    x1 = jax.random.normal(k1, (2, 4, 16, 16), dtype=jnp.float32)
    ok &= _check(x1, 4, 3, True)
    ok &= _check(x1, 3, 1, False)

    # lanes path with a row count that is not a multiple of 128 (partial blocks)
    x2 = jax.random.normal(k2, (3, 50, 20), dtype=jnp.float32)
    ok &= _check(x2, 5, 2, False)

    # wide-N streaming path (N > 512, non-multiple chunk), quantized to force ties
    x3 = jnp.round(jax.random.normal(k3, (8, 777), dtype=jnp.float32) * 4.0) / 4.0
    ok &= _check(x3, 5, 1, True)
    ok &= _check(x3, 3, 1, False)

    print("KERNEL_OK" if ok else "MISMATCH")
</pallas_src>

<mosaic_0001>
module attributes {stable_mosaic.version = 11 : i64} {
  func.func @_topk_lanes_kernel(%arg0: i32, %arg1: memref<128x16xf32, #tpu.memory_space<vmem>>, %arg2: memref<4x128xf32, #tpu.memory_space<vmem>>, %arg3: memref<4x128xi32, #tpu.memory_space<vmem>>) attributes {dimension_semantics = [#tpu.dimension_semantics<parallel>], iteration_bounds = array<i64: 1>, scalar_prefetch = 0 : i64, scratch_operands = 0 : i64, tpu.core_type = #tpu.core_type<tc>, window_params = [{transform_indices = @transform_0, window_bounds = array<i64: 128, 16>}, {transform_indices = @transform_1, window_bounds = array<i64: 4, 128>}, {transform_indices = @transform_2, window_bounds = array<i64: 4, 128>}]} {
    %c0 = arith.constant 0 : index
    %c0_0 = arith.constant 0 : index
    %0 = vector.load %arg1[%c0, %c0_0] : memref<128x16xf32, #tpu.memory_space<vmem>>, vector<128x16xf32>
    %1 = tpu.transpose %0, [1, 0] : vector<128x16xf32> -> vector<16x128xf32>
    %2 = tpu.bitcast %1 : vector<16x128xf32> -> vector<16x128xi32>
    %c0_i32 = arith.constant 0 : i32
    %3 = vector.broadcast %c0_i32 : i32 to vector<16x128xi32>
    %4 = arith.cmpi slt, %2, %3 : vector<16x128xi32>
    %c2147483647_i32 = arith.constant 2147483647 : i32
    %5 = vector.broadcast %c2147483647_i32 : i32 to vector<16x128xi32>
    %6 = arith.xori %2, %5 : vector<16x128xi32>
    %7 = arith.select %4, %6, %2 : vector<16x128xi1>, vector<16x128xi32>
    %c-2147483648_i32 = arith.constant -2147483648 : i32
    %c1_i32 = arith.constant 1 : i32
    %8 = arith.addi %c-2147483648_i32, %c1_i32 : i32
    %9 = vector.broadcast %8 : i32 to vector<16x128xi32>
    %10 = arith.maxsi %7, %9 : vector<16x128xi32>
    %11 = tpu.iota {dimensions = array<i32: 0>} : vector<16x128xi32>
    %cst = arith.constant dense<-2147483648> : vector<128xi32>
    %12 = vector.multi_reduction <maxsi>, %10, %cst [0] : vector<16x128xi32> to vector<128xi32>
    %13 = vector.shape_cast %12 : vector<128xi32> to vector<1x128xi32>
    %14 = vector.broadcast %13 : vector<1x128xi32> to vector<16x128xi32>
    %15 = arith.cmpi eq, %10, %14 : vector<16x128xi32>
    %c16_i32 = arith.constant 16 : i32
    %16 = vector.broadcast %c16_i32 : i32 to vector<16x128xi32>
    %17 = arith.select %15, %11, %16 : vector<16x128xi1>, vector<16x128xi32>
    %cst_1 = arith.constant dense<2147483647> : vector<128xi32>
    %18 = vector.multi_reduction <minsi>, %17, %cst_1 [0] : vector<16x128xi32> to vector<128xi32>
    %19 = vector.shape_cast %18 : vector<128xi32> to vector<1x128xi32>
    %20 = vector.broadcast %19 : vector<1x128xi32> to vector<16x128xi32>
    %21 = arith.cmpi eq, %11, %20 : vector<16x128xi32>
    %c-2147483648_i32_2 = arith.constant -2147483648 : i32
    %22 = vector.broadcast %c-2147483648_i32_2 : i32 to vector<16x128xi32>
    %23 = arith.select %21, %22, %10 : vector<16x128xi1>, vector<16x128xi32>
    %c0_i32_3 = arith.constant 0 : i32
    %24 = vector.broadcast %c0_i32_3 : i32 to vector<1x128xi32>
    %25 = arith.cmpi slt, %13, %24 : vector<1x128xi32>
    %c2147483647_i32_4 = arith.constant 2147483647 : i32
    %26 = vector.broadcast %c2147483647_i32_4 : i32 to vector<1x128xi32>
    %27 = arith.xori %13, %26 : vector<1x128xi32>
    %28 = arith.select %25, %27, %13 : vector<1x128xi1>, vector<1x128xi32>
    %29 = tpu.bitcast %28 : vector<1x128xi32> -> vector<1x128xf32>
    %cst_5 = arith.constant dense<-2147483648> : vector<128xi32>
    %30 = vector.multi_reduction <maxsi>, %23, %cst_5 [0] : vector<16x128xi32> to vector<128xi32>
    %31 = vector.shape_cast %30 : vector<128xi32> to vector<1x128xi32>
    %32 = vector.broadcast %31 : vector<1x128xi32> to vector<16x128xi32>
    %33 = arith.cmpi eq, %23, %32 : vector<16x128xi32>
    %c16_i32_6 = arith.constant 16 : i32
    %34 = vector.broadcast %c16_i32_6 : i32 to vector<16x128xi32>
    %35 = arith.select %33, %11, %34 : vector<16x128xi1>, vector<16x128xi32>
    %cst_7 = arith.constant dense<2147483647> : vector<128xi32>
    %36 = vector.multi_reduction <minsi>, %35, %cst_7 [0] : vector<16x128xi32> to vector<128xi32>
    %37 = vector.shape_cast %36 : vector<128xi32> to vector<1x128xi32>
    %38 = vector.broadcast %37 : vector<1x128xi32> to vector<16x128xi32>
    %39 = arith.cmpi eq, %11, %38 : vector<16x128xi32>
    %c-2147483648_i32_8 = arith.constant -2147483648 : i32
    %40 = vector.broadcast %c-2147483648_i32_8 : i32 to vector<16x128xi32>
    %41 = arith.select %39, %40, %23 : vector<16x128xi1>, vector<16x128xi32>
    %c0_i32_9 = arith.constant 0 : i32
    %42 = vector.broadcast %c0_i32_9 : i32 to vector<1x128xi32>
    %43 = arith.cmpi slt, %31, %42 : vector<1x128xi32>
    %c2147483647_i32_10 = arith.constant 2147483647 : i32
    %44 = vector.broadcast %c2147483647_i32_10 : i32 to vector<1x128xi32>
    %45 = arith.xori %31, %44 : vector<1x128xi32>
    %46 = arith.select %43, %45, %31 : vector<1x128xi1>, vector<1x128xi32>
    %47 = tpu.bitcast %46 : vector<1x128xi32> -> vector<1x128xf32>
    %cst_11 = arith.constant dense<-2147483648> : vector<128xi32>
    %48 = vector.multi_reduction <maxsi>, %41, %cst_11 [0] : vector<16x128xi32> to vector<128xi32>
    %49 = vector.shape_cast %48 : vector<128xi32> to vector<1x128xi32>
    %50 = vector.broadcast %49 : vector<1x128xi32> to vector<16x128xi32>
    %51 = arith.cmpi eq, %41, %50 : vector<16x128xi32>
    %c16_i32_12 = arith.constant 16 : i32
    %52 = vector.broadcast %c16_i32_12 : i32 to vector<16x128xi32>
    %53 = arith.select %51, %11, %52 : vector<16x128xi1>, vector<16x128xi32>
    %cst_13 = arith.constant dense<2147483647> : vector<128xi32>
    %54 = vector.multi_reduction <minsi>, %53, %cst_13 [0] : vector<16x128xi32> to vector<128xi32>
    %55 = vector.shape_cast %54 : vector<128xi32> to vector<1x128xi32>
    %56 = vector.broadcast %55 : vector<1x128xi32> to vector<16x128xi32>
    %57 = arith.cmpi eq, %11, %56 : vector<16x128xi32>
    %c-2147483648_i32_14 = arith.constant -2147483648 : i32
    %58 = vector.broadcast %c-2147483648_i32_14 : i32 to vector<16x128xi32>
    %59 = arith.select %57, %58, %41 : vector<16x128xi1>, vector<16x128xi32>
    %c0_i32_15 = arith.constant 0 : i32
    %60 = vector.broadcast %c0_i32_15 : i32 to vector<1x128xi32>
    %61 = arith.cmpi slt, %49, %60 : vector<1x128xi32>
    %c2147483647_i32_16 = arith.constant 2147483647 : i32
    %62 = vector.broadcast %c2147483647_i32_16 : i32 to vector<1x128xi32>
    %63 = arith.xori %49, %62 : vector<1x128xi32>
    %64 = arith.select %61, %63, %49 : vector<1x128xi1>, vector<1x128xi32>
    %65 = tpu.bitcast %64 : vector<1x128xi32> -> vector<1x128xf32>
    %cst_17 = arith.constant dense<-2147483648> : vector<128xi32>
    %66 = vector.multi_reduction <maxsi>, %59, %cst_17 [0] : vector<16x128xi32> to vector<128xi32>
    %67 = vector.shape_cast %66 : vector<128xi32> to vector<1x128xi32>
    %68 = vector.broadcast %67 : vector<1x128xi32> to vector<16x128xi32>
    %69 = arith.cmpi eq, %59, %68 : vector<16x128xi32>
    %c16_i32_18 = arith.constant 16 : i32
    %70 = vector.broadcast %c16_i32_18 : i32 to vector<16x128xi32>
    %71 = arith.select %69, %11, %70 : vector<16x128xi1>, vector<16x128xi32>
    %cst_19 = arith.constant dense<2147483647> : vector<128xi32>
    %72 = vector.multi_reduction <minsi>, %71, %cst_19 [0] : vector<16x128xi32> to vector<128xi32>
    %73 = vector.shape_cast %72 : vector<128xi32> to vector<1x128xi32>
    %c0_i32_20 = arith.constant 0 : i32
    %74 = vector.broadcast %c0_i32_20 : i32 to vector<1x128xi32>
    %75 = arith.cmpi slt, %67, %74 : vector<1x128xi32>
    %c2147483647_i32_21 = arith.constant 2147483647 : i32
    %76 = vector.broadcast %c2147483647_i32_21 : i32 to vector<1x128xi32>
    %77 = arith.xori %67, %76 : vector<1x128xi32>
    %78 = arith.select %75, %77, %67 : vector<1x128xi1>, vector<1x128xi32>
    %79 = tpu.bitcast %78 : vector<1x128xi32> -> vector<1x128xf32>
    %80 = tpu.concatenate %29, %47, %65, %79 in 0 : vector<1x128xf32>, vector<1x128xf32>, vector<1x128xf32>, vector<1x128xf32> -> vector<4x128xf32>
    %c0_22 = arith.constant 0 : index
    %c0_23 = arith.constant 0 : index
    %81 = vector.load %arg2[%c0_22, %c0_23] : memref<4x128xf32, #tpu.memory_space<vmem>>, vector<4x128xf32>
    tpu.vector_store %arg2[%c0_22, %c0_23], %80 {strides = array<i32>} : memref<4x128xf32, #tpu.memory_space<vmem>>, vector<4x128xf32>,
    %82 = tpu.concatenate %19, %37, %55, %73 in 0 : vector<1x128xi32>, vector<1x128xi32>, vector<1x128xi32>, vector<1x128xi32> -> vector<4x128xi32>
    %c0_24 = arith.constant 0 : index
    %c0_25 = arith.constant 0 : index
    %83 = vector.load %arg3[%c0_24, %c0_25] : memref<4x128xi32, #tpu.memory_space<vmem>>, vector<4x128xi32>
    tpu.vector_store %arg3[%c0_24, %c0_25], %82 {strides = array<i32>} : memref<4x128xi32, #tpu.memory_space<vmem>>, vector<4x128xi32>,
    return
  }
  func.func @transform_0(%arg0: i32) -> (i32, i32) {
    %c0_i32 = arith.constant 0 : i32
    %c0_i32_0 = arith.constant 0 : i32
    return %arg0, %c0_i32 : i32, i32
  }
  func.func @transform_1(%arg0: i32) -> (i32, i32) {
    %c0_i32 = arith.constant 0 : i32
    %c0_i32_0 = arith.constant 0 : i32
    return %c0_i32, %arg0 : i32, i32
  }
  func.func @transform_2(%arg0: i32) -> (i32, i32) {
    %c0_i32 = arith.constant 0 : i32
    %c0_i32_0 = arith.constant 0 : i32
    return %c0_i32, %arg0 : i32, i32
  }
}

</mosaic_0001>

<llo_original>
// kernel: tpu_custom_call.1
$region0: #{tpu_custom_call.1}
  #allocation0 [shape = 'u32[]', space=smem, size = 0x4, offset = 0x4, fixed_abs, tag = 'smem constant byte address 0x4 - core index']
  #allocation1 [shape = 'u32[144,128]{1,0:T(1,128)}', space=vmem, size = 0x12000, scoped, tag = 'internal scratch']
  %s0 = inlined_call_operand.vmem [shape: f32[128,16], index: 0, kind: input, shape index: {}]
  %s1 = inlined_call_operand.hbm [shape: f32[4,128], index: 1, kind: output, shape index: {0}]
  %s2 = inlined_call_operand.hbm [shape: s32[4,128], index: 2, kind: output, shape index: {1}]
  %3 = xla_tuple %s1, %s2
  %s4 = sld [smem:[#allocation0]]
  $region22: #{tpu_custom_call.1} parent=0
    _
  %s6 = ssub.s32 1, %s4
  %s7 = scalar_select 0, %s6, %s4
  $region1: #{tpu_custom_call.1} parent=0
    #allocation2 [shape = 'u8[2048]{0}', space=vmem, size = 0x800, scoped, tag = 'output window, operand 0, single buffered']
    #allocation3 [shape = 's32[1]{0}', space=sflag, size = 0x4, scoped, tag = 'scoped memory for tpu_custom_call.1']
    #allocation4 [shape = 'u8[2048]{0}', space=vmem, size = 0x800, scoped, tag = 'output window, operand 1, single buffered']
    #allocation5 [shape = 's32[1]{0}', space=sflag, size = 0x4, scoped, tag = 'scoped memory for tpu_custom_call.1']
    %8 = vsyncpa [#allocation3], 0
    %9 = vsyncpa [#allocation5], 0
    // Predicated region
    $region2: #{tpu_custom_call.1} parent=1 // pred_check
      _
    $region3: #{tpu_custom_call.1} parent=1 // pred_check_branch
      %11 = sbr.rel (0) target = $region5
    $region4: #{tpu_custom_call.1} parent=1 // pred_region
      _
    $region5: #{tpu_custom_call.1} parent=1 // pred_fallthru
      _
    %v12 = vld [vmem:[%s0] sm:$0xff]
    %v13 = vld [vmem:[%s0 + $0x8] sm:$0xff]
    %v14 = vld [vmem:[%s0 + $0x10] sm:$0xff]
    %v15 = vld [vmem:[%s0 + $0x18] sm:$0xff]
    %v16 = vld [vmem:[%s0 + $0x20] sm:$0xff]
    %v17 = vld [vmem:[%s0 + $0x28] sm:$0xff]
    %v18 = vld [vmem:[%s0 + $0x30] sm:$0xff]
    %v19 = vld [vmem:[%s0 + $0x38] sm:$0xff]
    %v20 = vld [vmem:[%s0 + $0x40] sm:$0xff]
    %v21 = vld [vmem:[%s0 + $0x48] sm:$0xff]
    %v22 = vld [vmem:[%s0 + $0x50] sm:$0xff]
    %v23 = vld [vmem:[%s0 + $0x58] sm:$0xff]
    %v24 = vld [vmem:[%s0 + $0x60] sm:$0xff]
    %v25 = vld [vmem:[%s0 + $0x68] sm:$0xff]
    %v26 = vld [vmem:[%s0 + $0x70] sm:$0xff]
    %v27 = vld [vmem:[%s0 + $0x78] sm:$0xff]
    %28 = vxpose.xlu0.b32.start [1/16] %v12, 128
    %29 = vxpose.xlu0.b32.cont [2/16] %v13, 128
    %30 = vxpose.xlu0.b32.cont [3/16] %v14, 128
    %31 = vxpose.xlu0.b32.cont [4/16] %v15, 128
    %32 = vxpose.xlu0.b32.cont [5/16] %v16, 128
    %33 = vxpose.xlu0.b32.cont [6/16] %v17, 128
    %34 = vxpose.xlu0.b32.cont [7/16] %v18, 128
    %35 = vxpose.xlu0.b32.cont [8/16] %v19, 128
    %36 = vxpose.xlu0.b32.cont [9/16] %v20, 128
    %37 = vxpose.xlu0.b32.cont [10/16] %v21, 128
    %38 = vxpose.xlu0.b32.cont [11/16] %v22, 128
    %39 = vxpose.xlu0.b32.cont [12/16] %v23, 128
    %40 = vxpose.xlu0.b32.cont [13/16] %v24, 128
    %41 = vxpose.xlu0.b32.cont [14/16] %v25, 128
    %42 = vxpose.xlu0.b32.cont [15/16] %v26, 128
    %43 = vxpose.xlu0.b32.end [16/16] %v27, 128
    %v44 = vpop.trf.xlu0
    %v45 = vpop.trf.xlu0
    %v46 = vpop.trf.xlu0
    %v47 = vpop.trf.xlu0
    %v48 = vpop.trf.xlu0
    %v49 = vpop.trf.xlu0
    %v50 = vpop.trf.xlu0
    %v51 = vpop.trf.xlu0
    %v52 = vpop.trf.xlu0
    %v53 = vpop.trf.xlu0
    %v54 = vpop.trf.xlu0
    %v55 = vpop.trf.xlu0
    %v56 = vpop.trf.xlu0
    %v57 = vpop.trf.xlu0
    %v58 = vpop.trf.xlu0
    %v59 = vpop.trf.xlu0
    %vm62 = vcmp.lt.s32.totalorder %v44, 0
    %vm63 = vcmp.lt.s32.totalorder %v45, 0
    %v64 = vxor.u32 %v44, 2147483647
    %v65 = vxor.u32 %v45, 2147483647
    %v66 = vsel %vm62, %v64, %v44
    %v67 = vsel %vm63, %v65, %v45
    %vm68 = vcmp.gt.s32.totalorder %v66, 2147483649
    %v69 = vsel %vm68, %v66, 2147483649
    %vm70 = vcmp.gt.s32.totalorder %v67, 2147483649
    %v71 = vsel %vm70, %v67, 2147483649
    %v72 = vlaneseq
    %v73 = vshrl.u32 %v72, 7
    %v74 = vadd.s32 %v73, 8
    %vm75 = vcmp.gt.s32.totalorder %v69, %v71
    %v76 = vsel %vm75, %v69, %v71
    %v77 = vrot.slane %v76, 4
    %vm78 = vcmp.gt.s32.totalorder %v76, %v77
    %v79 = vsel %vm78, %v76, %v77
    %v80 = vrot.slane %v79, 2
    %vm81 = vcmp.gt.s32.totalorder %v79, %v80
    %v82 = vsel %vm81, %v79, %v80
    %v83 = vrot.slane %v82, 1
    %vm84 = vcmp.gt.s32.totalorder %v82, %v83
    %v85 = vsel %vm84, %v82, %v83
    %vm86 = vcmp.eq.s32.totalorder %v69, %v85
    %vm87 = vcmp.eq.s32.totalorder %v71, %v85
    %v88 = vsel %vm86, %v73, 16
    %v89 = vsel %vm87, %v74, 16
    %vm90 = vcmp.lt.s32.totalorder %v88, %v89
    %v91 = vsel %vm90, %v88, %v89
    %v92 = vrot.slane %v91, 4
    %vm93 = vcmp.lt.s32.totalorder %v91, %v92
    %v94 = vsel %vm93, %v91, %v92
    %v95 = vrot.slane %v94, 2
    %vm96 = vcmp.lt.s32.totalorder %v94, %v95
    %v97 = vsel %vm96, %v94, %v95
    %v98 = vrot.slane %v97, 1
    %vm99 = vcmp.lt.s32.totalorder %v97, %v98
    %v100 = vsel %vm99, %v97, %v98
    %vm101 = vcmp.eq.s32.totalorder %v73, %v100
    %vm102 = vcmp.eq.s32.totalorder %v74, %v100
    %v103 = vsel %vm101, 2147483648, %v69
    %v104 = vsel %vm102, 2147483648, %v71
    %vm105 = vcmp.lt.s32.totalorder %v85, 0
    %v106 = vxor.u32 %v85, 2147483647
    %v107 = vsel %vm105, %v106, %v85
    %vm109 = vcmp.gt.s32.totalorder %v103, %v104
    %v110 = vsel %vm109, %v103, %v104
    %v111 = vrot.slane %v110, 4
    %vm112 = vcmp.gt.s32.totalorder %v110, %v111
    %v113 = vsel %vm112, %v110, %v111
    %v114 = vrot.slane %v113, 2
    %vm115 = vcmp.gt.s32.totalorder %v113, %v114
    %v116 = vsel %vm115, %v113, %v114
    %v117 = vrot.slane %v116, 1
    %vm118 = vcmp.gt.s32.totalorder %v116, %v117
    %v119 = vsel %vm118, %v116, %v117
    %vm120 = vcmp.eq.s32.totalorder %v103, %v119
    %vm121 = vcmp.eq.s32.totalorder %v104, %v119
    %v122 = vsel %vm120, %v73, 16
    %v123 = vsel %vm121, %v74, 16
    %vm124 = vcmp.lt.s32.totalorder %v122, %v123
    %v125 = vsel %vm124, %v122, %v123
    %v126 = vrot.slane %v125, 4
    %vm127 = vcmp.lt.s32.totalorder %v125, %v126
    %v128 = vsel %vm127, %v125, %v126
    %v129 = vrot.slane %v128, 2
    %vm130 = vcmp.lt.s32.totalorder %v128, %v129
    %v131 = vsel %vm130, %v128, %v129
    %v132 = vrot.slane %v131, 1
    %vm133 = vcmp.lt.s32.totalorder %v131, %v132
    %v134 = vsel %vm133, %v131, %v132
    %vm135 = vcmp.eq.s32.totalorder %v73, %v134
    %vm136 = vcmp.eq.s32.totalorder %v74, %v134
    %v137 = vsel %vm135, 2147483648, %v103
    %v138 = vsel %vm136, 2147483648, %v104
    %vm139 = vcmp.lt.s32.totalorder %v119, 0
    %v140 = vxor.u32 %v119, 2147483647
    %v141 = vsel %vm139, %v140, %v119
    %vm143 = vcmp.gt.s32.totalorder %v137, %v138
    %v144 = vsel %vm143, %v137, %v138
    %v145 = vrot.slane %v144, 4
    %vm146 = vcmp.gt.s32.totalorder %v144, %v145
    %v147 = vsel %vm146, %v144, %v145
    %v148 = vrot.slane %v147, 2
    %vm149 = vcmp.gt.s32.totalorder %v147, %v148
    %v150 = vsel %vm149, %v147, %v148
    %v151 = vrot.slane %v150, 1
    %vm152 = vcmp.gt.s32.totalorder %v150, %v151
    %v153 = vsel %vm152, %v150, %v151
    %vm154 = vcmp.eq.s32.totalorder %v137, %v153
    %vm155 = vcmp.eq.s32.totalorder %v138, %v153
    %v156 = vsel %vm154, %v73, 16
    %v157 = vsel %vm155, %v74, 16
    %vm158 = vcmp.lt.s32.totalorder %v156, %v157
    %v159 = vsel %vm158, %v156, %v157
    %v160 = vrot.slane %v159, 4
    %vm161 = vcmp.lt.s32.totalorder %v159, %v160
    %v162 = vsel %vm161, %v159, %v160
    %v163 = vrot.slane %v162, 2
    %vm164 = vcmp.lt.s32.totalorder %v162, %v163
    %v165 = vsel %vm164, %v162, %v163
    %v166 = vrot.slane %v165, 1
    %vm167 = vcmp.lt.s32.totalorder %v165, %v166
    %v168 = vsel %vm167, %v165, %v166
    %vm169 = vcmp.eq.s32.totalorder %v73, %v168
    %vm170 = vcmp.eq.s32.totalorder %v74, %v168
    %v171 = vsel %vm169, 2147483648, %v137
    %v172 = vsel %vm170, 2147483648, %v138
    %vm173 = vcmp.lt.s32.totalorder %v153, 0
    %v174 = vxor.u32 %v153, 2147483647
    %v175 = vsel %vm173, %v174, %v153
    %vm177 = vcmp.gt.s32.totalorder %v171, %v172
    %v178 = vsel %vm177, %v171, %v172
    %v179 = vrot.slane %v178, 4
    %vm180 = vcmp.gt.s32.totalorder %v178, %v179
    %v181 = vsel %vm180, %v178, %v179
    %v182 = vrot.slane %v181, 2
    %vm183 = vcmp.gt.s32.totalorder %v181, %v182
    %v184 = vsel %vm183, %v181, %v182
    %v185 = vrot.slane %v184, 1
    %vm186 = vcmp.gt.s32.totalorder %v184, %v185
    %v187 = vsel %vm186, %v184, %v185
    %vm188 = vcmp.eq.s32.totalorder %v171, %v187
    %vm189 = vcmp.eq.s32.totalorder %v172, %v187
    %v190 = vsel %vm188, %v73, 16
    %v191 = vsel %vm189, %v74, 16
    %vm192 = vcmp.lt.s32.totalorder %v190, %v191
    %v193 = vsel %vm192, %v190, %v191
    %v194 = vrot.slane %v193, 4
    %vm195 = vcmp.lt.s32.totalorder %v193, %v194
    %v196 = vsel %vm195, %v193, %v194
    %v197 = vrot.slane %v196, 2
    %vm198 = vcmp.lt.s32.totalorder %v196, %v197
    %v199 = vsel %vm198, %v196, %v197
    %v200 = vrot.slane %v199, 1
    %vm201 = vcmp.lt.s32.totalorder %v199, %v200
    %v202 = vsel %vm201, %v199, %v200
    %vm203 = vcmp.lt.s32.totalorder %v187, 0
    %v204 = vxor.u32 %v187, 2147483647
    %v205 = vsel %vm203, %v204, %v187
    %vm207 = vcmask 1040384
    %v208 = vsel %vm207, %v107, %v141
    %vm209 = vcmask 1041408
    %v210 = vsel %vm209, %v208, %v175
    %vm211 = vcmask 1042432
    %v212 = vsel %vm211, %v210, %v205
    %213 = vst [vmem:[#allocation2] sm:$0xf] %v212
    %v214 = vsel %vm207, %v100, %v134
    %v215 = vsel %vm209, %v214, %v168
    %v216 = vsel %vm211, %v215, %v202
    %217 = vst [vmem:[#allocation4] sm:$0xf] %v216
    // Predicated region
    $region6: #{tpu_custom_call.1} parent=1 // pred_check
      _
    $region7: #{tpu_custom_call.1} parent=1 // pred_check_branch
      %219 = sbr.rel (0) target = $region9
    $region8: #{tpu_custom_call.1} parent=1 // pred_region
      %s221 = ssub.s32 64, 64
      %222 = vsyncadd [#allocation3], %s221
      %s224 = sshll.u32 [#allocation2], 4
      %s225 = int_to_ptr.vmem [resolvable:$true] %s224
      %227 = dma.vmem_to_hbm [thread:$0]  %s225, 64, %s1, [#allocation3]
    $region9: #{tpu_custom_call.1} parent=1 // pred_fallthru
      _
    // Predicated region
    $region10: #{tpu_custom_call.1} parent=1 // pred_check
      _
    $region11: #{tpu_custom_call.1} parent=1 // pred_check_branch
      %229 = sbr.rel (0) target = $region13
    $region12: #{tpu_custom_call.1} parent=1 // pred_region
      %s231 = ssub.s32 64, 64
      %232 = vsyncadd [#allocation5], %s231
      %s234 = sshll.u32 [#allocation4], 4
      %s235 = int_to_ptr.vmem [resolvable:$true] %s234
      %237 = dma.vmem_to_hbm [thread:$0]  %s235, 64, %s2, [#allocation5]
    $region13: #{tpu_custom_call.1} parent=1 // pred_fallthru
      _
    // Predicated region
    $region14: #{tpu_custom_call.1} parent=1 // pred_check
      _
    $region15: #{tpu_custom_call.1} parent=1 // pred_check_branch
      %239 = sbr.rel (0) target = $region17
    $region16: #{tpu_custom_call.1} parent=1 // pred_region
      %240 = dma.done [#allocation3], 64
    $region17: #{tpu_custom_call.1} parent=1 // pred_fallthru
      _
    // Predicated region
    $region18: #{tpu_custom_call.1} parent=1 // pred_check
      _
    $region19: #{tpu_custom_call.1} parent=1 // pred_check_branch
      %242 = sbr.rel (0) target = $region21
    $region20: #{tpu_custom_call.1} parent=1 // pred_region
      %243 = dma.done [#allocation5], 64
    $region21: #{tpu_custom_call.1} parent=1 // pred_fallthru
      _
    %244 = vsyncpa [#allocation3], 1
    %245 = vsyncpa [#allocation5], 1

</llo_original>
